<compile_context>
chip_gen: v7x
topology: tpu7x:2x2x1
jax: 0.10.0
libtpu: 0.0.40
codegen_flags: <defaults>
</compile_context>

<pallas_src>
import jax
import jax.numpy as jnp
from jax import lax
from jax.experimental import pallas as pl
from jax.experimental.pallas import tpu as pltpu

B = 2                 # batch
C, H, W = 3, 10, 10
CIN = C * H * W       # 300
CIN_PAD = 384         # 300 padded up to a multiple of 128 for clean MXU K passes
COUT = 8
DOUT = 1


def simple_model_kernel(x_ref, wc_ref, bc_ref, wl_ref, bl_ref, o_ref):
    # x_ref:  [B, 384]  VMEM  flattened + zero-padded NCHW input
    # wc_ref: [8, 384]  VMEM  conv weight, lane-dense, zero-padded on K
    # bc_ref: [1, 8]    VMEM  conv bias row
    # wl_ref: [1, 8]    VMEM  linear weight row
    # bl_ref: [1, 1]    SMEM  linear bias scalar
    x = x_ref[...]

    # Conv2d(3, 8, kernel_size=10) on a 10x10 input == contraction over flattened (C,H,W).
    # Contract last dims of x [B,384] and wc [8,384] -> [B,8]; zero padding contributes 0.
    h = lax.dot_general(
        x, wc_ref[...],
        dimension_numbers=(((1,), (1,)), ((), ())),
        preferred_element_type=jnp.float32,
    )

    # Bias + ReLU (VPU)
    h = jnp.maximum(h + bc_ref[...], 0.0)

    # Dropout: identity in eval/inference mode.
    # TODO(synk): training-mode dropout (p=0.5) would need pltpu.prng_random_bits masking.

    # Linear(8, 1): 8-wide multiply + row-sum on the VPU/XLU (no second MXU matmul).
    y = jnp.sum(h * wl_ref[...], axis=-1, keepdims=True) + bl_ref[0, 0]

    # Sigmoid (exp on EUP)
    o_ref[...] = jax.nn.sigmoid(y).astype(o_ref.dtype)


def prepare_params(wc, bc, wl, bl):
    """One-time weight prep (hoisted out of the forward path).

    wc: [8, 3, 10, 10]  conv weight
    bc: [8]             conv bias
    wl: [1, 8]          linear weight
    bl: [1]             linear bias
    """
    wc_prep = jnp.pad(wc.reshape(COUT, CIN).astype(jnp.float32),
                      ((0, 0), (0, CIN_PAD - CIN)))            # [8, 384] lane-dense
    bc_prep = bc.reshape(1, COUT).astype(jnp.float32)          # [1, 8]
    wl_prep = wl.reshape(DOUT, COUT).astype(jnp.float32)       # [1, 8] row (not [8,1])
    bl_prep = bl.reshape(1, 1).astype(jnp.float32)             # [1, 1] SMEM scalar
    return wc_prep, bc_prep, wl_prep, bl_prep


def simple_model_forward(x_nchw, wc_prep, bc_prep, wl_prep, bl_prep):
    """x_nchw: [B, 3, 10, 10] float32.  Returns [B, 1] float32."""
    b = x_nchw.shape[0]
    # Only per-call glue: flatten + zero-pad x to the pre-padded K of the weight.
    x_flat = x_nchw.reshape(b, CIN)
    x_pad = jnp.pad(x_flat, ((0, 0), (0, CIN_PAD - CIN)))      # [B, 384]

    vmem = pl.BlockSpec(memory_space=pltpu.MemorySpace.VMEM)
    smem = pl.BlockSpec(memory_space=pltpu.MemorySpace.SMEM)
    return pl.pallas_call(
        simple_model_kernel,
        out_shape=jax.ShapeDtypeStruct((b, DOUT), jnp.float32),
        in_specs=[vmem, vmem, vmem, vmem, smem],
        out_specs=vmem,
    )(x_pad, wc_prep, bc_prep, wl_prep, bl_prep)
    # NOTE: if batch ever scales, add grid=(pl.cdiv(B, TB),) with a (TB, 384) x block,
    # dimension_semantics=("parallel",) (needed to use v7x's 2nd TensorCore), and size TB
    # against v7x's 64 MiB VMEM. At B=2 the whole problem fits in one un-gridded call.


def init_params(key):
    """Deterministic parameter init mimicking PyTorch default (uniform) init shapes."""
    k1, k2, k3, k4 = jax.random.split(key, 4)
    # Conv2d(3, 8, kernel_size=10): weight [8, 3, 10, 10], bias [8]
    fan_in_conv = C * H * W
    bound_c = 1.0 / jnp.sqrt(fan_in_conv)
    wc = jax.random.uniform(k1, (COUT, C, H, W), jnp.float32, -bound_c, bound_c)
    bc = jax.random.uniform(k2, (COUT,), jnp.float32, -bound_c, bound_c)
    # Linear(8, 1): weight [1, 8], bias [1]
    bound_l = 1.0 / jnp.sqrt(COUT)
    wl = jax.random.uniform(k3, (DOUT, COUT), jnp.float32, -bound_l, bound_l)
    bl = jax.random.uniform(k4, (DOUT,), jnp.float32, -bound_l, bound_l)
    return wc, bc, wl, bl


if __name__ == "__main__":
    key = jax.random.PRNGKey(0)
    kx, kp = jax.random.split(key)
    x = jax.random.normal(kx, (B, C, H, W), dtype=jnp.float32)
    wc, bc, wl, bl = init_params(kp)

    # One-time weight prep (outside the forward path).
    wc_prep, bc_prep, wl_prep, bl_prep = prepare_params(wc, bc, wl, bl)

    out = simple_model_forward(x, wc_prep, bc_prep, wl_prep, bl_prep)
    out = jax.block_until_ready(out)

    # Reference check in plain JAX on the ORIGINAL (unprepped) weights.
    h_ref = jnp.maximum(x.reshape(B, CIN) @ wc.reshape(COUT, CIN).T + bc, 0.0)
    y_ref = jax.nn.sigmoid(h_ref @ wl.reshape(DOUT, COUT).T + bl)
    assert out.shape == (B, 1)
    assert jnp.allclose(out, y_ref, atol=1e-5), (out, y_ref)

    print("KERNEL_OK")
</pallas_src>

<mosaic_0001>
module attributes {stable_mosaic.version = 11 : i64} {
  func.func @simple_model_kernel(%arg0: memref<2x384xf32, #tpu.memory_space<vmem>>, %arg1: memref<8x384xf32, #tpu.memory_space<vmem>>, %arg2: memref<1x8xf32, #tpu.memory_space<vmem>>, %arg3: memref<1x8xf32, #tpu.memory_space<vmem>>, %arg4: memref<1x1xf32, #tpu.memory_space<smem>>, %arg5: memref<2x1xf32, #tpu.memory_space<vmem>>) attributes {dimension_semantics = [], scalar_prefetch = 0 : i64, scratch_operands = 0 : i64, tpu.core_type = #tpu.core_type<tc>} {
    %c0 = arith.constant 0 : index
    %c0_0 = arith.constant 0 : index
    %0 = vector.load %arg0[%c0, %c0_0] : memref<2x384xf32, #tpu.memory_space<vmem>>, vector<2x384xf32>
    %c0_1 = arith.constant 0 : index
    %c0_2 = arith.constant 0 : index
    %1 = vector.load %arg1[%c0_1, %c0_2] : memref<8x384xf32, #tpu.memory_space<vmem>>, vector<8x384xf32>
    %cst = arith.constant dense<0.000000e+00> : vector<2x8xf32>
    %2 = tpu.matmul %0, %1, %cst {dimension_numbers = #tpu.dot_dimension_numbers<[1], [1], [0], [0], [0, 0, 1, 0], [], []>} : vector<2x384xf32>, vector<8x384xf32>, vector<2x8xf32> -> vector<2x8xf32>
    %c0_3 = arith.constant 0 : index
    %c0_4 = arith.constant 0 : index
    %3 = vector.load %arg2[%c0_3, %c0_4] : memref<1x8xf32, #tpu.memory_space<vmem>>, vector<1x8xf32>
    %4 = vector.broadcast %3 : vector<1x8xf32> to vector<2x8xf32>
    %5 = arith.addf %2, %4 : vector<2x8xf32>
    %cst_5 = arith.constant 0.000000e+00 : f32
    %6 = vector.broadcast %cst_5 : f32 to vector<2x8xf32>
    %7 = arith.maximumf %5, %6 : vector<2x8xf32>
    %c0_6 = arith.constant 0 : index
    %c0_7 = arith.constant 0 : index
    %8 = vector.load %arg3[%c0_6, %c0_7] : memref<1x8xf32, #tpu.memory_space<vmem>>, vector<1x8xf32>
    %9 = vector.broadcast %8 : vector<1x8xf32> to vector<2x8xf32>
    %10 = arith.mulf %7, %9 : vector<2x8xf32>
    %cst_8 = arith.constant dense<0.000000e+00> : vector<2xf32>
    %11 = vector.multi_reduction <add>, %10, %cst_8 [1] : vector<2x8xf32> to vector<2xf32>
    %12 = vector.shape_cast %11 : vector<2xf32> to vector<2x1xf32>
    %c0_9 = arith.constant 0 : index
    %c0_10 = arith.constant 0 : index
    %13 = memref.load %arg4[%c0_9, %c0_10] : memref<1x1xf32, #tpu.memory_space<smem>>
    %14 = vector.broadcast %13 : f32 to vector<2x1xf32>
    %15 = arith.addf %12, %14 : vector<2x1xf32>
    %16 = arith.negf %15 : vector<2x1xf32>
    %17 = math.exp %16 : vector<2x1xf32>
    %cst_11 = arith.constant 1.000000e+00 : f32
    %18 = vector.broadcast %cst_11 : f32 to vector<2x1xf32>
    %19 = arith.addf %18, %17 : vector<2x1xf32>
    %20 = arith.divf %18, %19 : vector<2x1xf32>
    %c0_12 = arith.constant 0 : index
    %c0_13 = arith.constant 0 : index
    %21 = vector.load %arg5[%c0_12, %c0_13] : memref<2x1xf32, #tpu.memory_space<vmem>>, vector<2x1xf32>
    tpu.vector_store %arg5[%c0_12, %c0_13], %20 {strides = array<i32>} : memref<2x1xf32, #tpu.memory_space<vmem>>, vector<2x1xf32>,
    return
  }
}

</mosaic_0001>

<llo_original>
// kernel: tpu_custom_call.1
$region0: #{tpu_custom_call.1}
  #allocation0 [shape = 'u32[]', space=smem, size = 0x4, offset = 0x4, fixed_abs, tag = 'smem constant byte address 0x4 - core index']
  #allocation1 [shape = 'u32[144,128]{1,0:T(1,128)}', space=vmem, size = 0x12000, scoped, tag = 'internal scratch']
  #allocation2 [shape = 'f32[1,1]{1,0:T(1,128)S(6)}', space=smem, size = 0x200, scoped, tag = 'scoped memory for tpu_custom_call.1']
  %s0 = inlined_call_operand.hbm [shape: f32[2,384], index: 0, kind: input, shape index: {}]
  %s1 = inlined_call_operand.hbm [shape: f32[8,384], index: 1, kind: input, shape index: {}]
  %s2 = inlined_call_operand.vmem [shape: f32[1,8], index: 2, kind: input, shape index: {}]
  %s3 = inlined_call_operand.vmem [shape: f32[1,8], index: 3, kind: input, shape index: {}]
  %s4 = inlined_call_operand.<no memory space> [shape: f32[1,1], index: 4, kind: input, shape index: {}]
  %s5 = inlined_call_operand.vmem [shape: f32[2,1], index: 5, kind: output, shape index: {}]
  %s6 = sld [smem:[#allocation0]]
  $region38: #{tpu_custom_call.1} parent=0
    _
  %s8 = ssub.s32 1, %s6
  %s9 = scalar_select 0, %s8, %s6
  %10 = sst [smem:[#allocation2]] %s4
  $region1: #{tpu_custom_call.1} parent=0
    #allocation3 [shape = 'u8[3072]{0}', space=vmem, size = 0xc00, scoped, tag = 'input window, operand 0, single buffered']
    #allocation4 [shape = 's32[1]{0}', space=sflag, size = 0x4, scoped, tag = 'scoped memory for tpu_custom_call.1']
    #allocation5 [shape = 'u8[12288]{0}', space=vmem, size = 0x3000, scoped, tag = 'input window, operand 1, single buffered']
    #allocation6 [shape = 's32[1]{0}', space=sflag, size = 0x4, scoped, tag = 'scoped memory for tpu_custom_call.1']
    %11 = vsyncpa [#allocation4], 0
    %12 = vsyncpa [#allocation6], 0
    // Predicated region
    $region2: #{tpu_custom_call.1} parent=1 // pred_check
      _
    $region3: #{tpu_custom_call.1} parent=1 // pred_check_branch
      %14 = sbr.rel (0) target = $region5
    $region4: #{tpu_custom_call.1} parent=1 // pred_region
      %s16 = ssub.s32 96, 96
      %17 = vsyncadd [#allocation4], %s16
      %s19 = sshll.u32 [#allocation3], 4
      %s20 = int_to_ptr.vmem [resolvable:$true] %s19
      %22 = dma.hbm_to_vmem [thread:$0]  %s0, 96, %s20, [#allocation4]
    $region5: #{tpu_custom_call.1} parent=1 // pred_fallthru
      _
    // Predicated region
    $region6: #{tpu_custom_call.1} parent=1 // pred_check
      _
    $region7: #{tpu_custom_call.1} parent=1 // pred_check_branch
      %24 = sbr.rel (0) target = $region9
    $region8: #{tpu_custom_call.1} parent=1 // pred_region
      %s26 = ssub.s32 384, 384
      %27 = vsyncadd [#allocation6], %s26
      %s29 = sshll.u32 [#allocation5], 4
      %s30 = int_to_ptr.vmem [resolvable:$true] %s29
      %32 = dma.hbm_to_vmem [thread:$0]  %s1, 384, %s30, [#allocation6]
    $region9: #{tpu_custom_call.1} parent=1 // pred_fallthru
      _
    // Predicated region
    $region10: #{tpu_custom_call.1} parent=1 // pred_check
      _
    $region11: #{tpu_custom_call.1} parent=1 // pred_check_branch
      %34 = sbr.rel (0) target = $region13
    $region12: #{tpu_custom_call.1} parent=1 // pred_region
      _
    $region13: #{tpu_custom_call.1} parent=1 // pred_fallthru
      _
    // Predicated region
    $region14: #{tpu_custom_call.1} parent=1 // pred_check
      _
    $region15: #{tpu_custom_call.1} parent=1 // pred_check_branch
      %36 = sbr.rel (0) target = $region17
    $region16: #{tpu_custom_call.1} parent=1 // pred_region
      _
    $region17: #{tpu_custom_call.1} parent=1 // pred_fallthru
      _
    // Predicated region
    $region18: #{tpu_custom_call.1} parent=1 // pred_check
      _
    $region19: #{tpu_custom_call.1} parent=1 // pred_check_branch
      %38 = sbr.rel (0) target = $region21
    $region20: #{tpu_custom_call.1} parent=1 // pred_region
      _
    $region21: #{tpu_custom_call.1} parent=1 // pred_fallthru
      _
    // Predicated region
    $region22: #{tpu_custom_call.1} parent=1 // pred_check
      _
    $region23: #{tpu_custom_call.1} parent=1 // pred_check_branch
      %40 = sbr.rel (0) target = $region25
    $region24: #{tpu_custom_call.1} parent=1 // pred_region
      %41 = dma.done [#allocation4], 96
    $region25: #{tpu_custom_call.1} parent=1 // pred_fallthru
      _
    // Predicated region
    $region26: #{tpu_custom_call.1} parent=1 // pred_check
      _
    $region27: #{tpu_custom_call.1} parent=1 // pred_check_branch
      %43 = sbr.rel (0) target = $region29
    $region28: #{tpu_custom_call.1} parent=1 // pred_region
      %44 = dma.done [#allocation6], 384
    $region29: #{tpu_custom_call.1} parent=1 // pred_fallthru
      _
    %v45 = vld [vmem:[#allocation3] sm:$0x3f]
    %v46 = vld [vmem:[#allocation5] sm:$0xff]
    %v47 = vld [vmem:[#allocation5 + $0x8] sm:$0xff]
    %v48 = vld [vmem:[#allocation5 + $0x10] sm:$0xff]
    %v49 = vld [vmem:[%s2] sm:$0x1]
    %v51 = vlaneseq
    %v52 = vshrl.u32 %v51, 7
    %v53 = vsub.s32 0, %v52
    %v54 = vrot.slane %v49, %v53
    %v57 = vcombine.high %v45, %v45
    %v59 = vunpack.c.l.s4 1983009808
    %v60 = vunpack.c.0.s8 %v59
    %v61 = vlaneseq
    %v62 = vshrl.u32 %v61, 7
    %v63 = vsub.s32 %v60, %v62
    %v64 = vrot.slane %v45, %v63
    %v66 = vunpack.c.l.s4 1983009808
    %v67 = vunpack.c.0.s8 %v66
    %v68 = vlaneseq
    %v69 = vshrl.u32 %v68, 7
    %v70 = vsub.s32 %v67, %v69
    %v71 = vrot.slane %v57, %v70
    %v72 = vcombine.high %v64, %v64
    %76 = vmatprep.subr.mxu0 %v47
    %77 = vmatpush1.xpose.msra.mxu0 %v46
    %78 = vmatprep.subr.mxu0 0.0
    %79 = vmatpush1.xpose.msra.mxu0 0.0
    %80 = vmatprep.subr.mxu0 0.0
    %81 = vmatpush1.xpose.msra.mxu0 0.0
    %82 = vmatprep.subr.mxu0 0.0
    %83 = vmatpush1.xpose.msra.mxu0 0.0
    %84 = vmatprep.subr.mxu0 0.0
    %85 = vmatpush1.xpose.msra.mxu0 0.0
    %86 = vmatprep.subr.mxu0 0.0
    %87 = vmatpush1.xpose.msra.mxu0 0.0
    %88 = vmatprep.subr.mxu0 0.0
    %89 = vmatpush1.xpose.msra.mxu0 0.0
    %90 = vmatprep.subr.mxu0 0.0
    %91 = vmatpush1.xpose.msra.mxu0 0.0
    %92 = vmatprep.subr.mxu0 0.0
    %93 = vmatpush1.xpose.msra.mxu0 0.0
    %94 = vmatprep.subr.mxu0 0.0
    %95 = vmatpush1.xpose.msra.mxu0 0.0
    %96 = vmatprep.subr.mxu0 0.0
    %97 = vmatpush1.xpose.msra.mxu0 0.0
    %98 = vmatprep.subr.mxu0 0.0
    %99 = vmatpush1.xpose.msra.mxu0 0.0
    %100 = vmatprep.subr.mxu0 0.0
    %101 = vmatpush1.xpose.msra.mxu0 0.0
    %102 = vmatprep.subr.mxu0 0.0
    %103 = vmatpush1.xpose.msra.mxu0 0.0
    %104 = vmatprep.subr.mxu0 0.0
    %105 = vmatpush1.xpose.msra.mxu0 0.0
    %106 = vmatprep.subr.mxu0 0.0
    %107 = vmatpush1.xpose.msra.mxu0 0.0
    %108 = vmatprep.subr.mxu0 0.0
    %109 = vmatpush1.xpose.msra.mxu0 0.0
    %110 = vmatprep.subr.mxu0 0.0
    %111 = vmatpush1.xpose.msra.mxu0 0.0
    %112 = vmatprep.subr.mxu0 0.0
    %113 = vmatpush1.xpose.msra.mxu0 0.0
    %114 = vmatprep.subr.mxu0 0.0
    %115 = vmatpush1.xpose.msra.mxu0 0.0
    %116 = vmatprep.subr.mxu0 0.0
    %117 = vmatpush1.xpose.msra.mxu0 0.0
    %118 = vmatprep.subr.mxu0 0.0
    %119 = vmatpush1.xpose.msra.mxu0 0.0
    %120 = vmatprep.subr.mxu0 0.0
    %121 = vmatpush1.xpose.msra.mxu0 0.0
    %122 = vmatprep.subr.mxu0 0.0
    %123 = vmatpush1.xpose.msra.mxu0 0.0
    %124 = vmatprep.subr.mxu0 0.0
    %125 = vmatpush1.xpose.msra.mxu0 0.0
    %126 = vmatprep.subr.mxu0 0.0
    %127 = vmatpush1.xpose.msra.mxu0 0.0
    %128 = vmatprep.subr.mxu0 0.0
    %129 = vmatpush1.xpose.msra.mxu0 0.0
    %130 = vmatprep.subr.mxu0 0.0
    %131 = vmatpush1.xpose.msra.mxu0 0.0
    %132 = vmatprep.subr.mxu0 0.0
    %133 = vmatpush1.xpose.msra.mxu0 0.0
    %134 = vmatprep.subr.mxu0 0.0
    %135 = vmatpush1.xpose.msra.mxu0 0.0
    %136 = vmatprep.subr.mxu0 0.0
    %137 = vmatpush1.xpose.msra.mxu0 0.0
    %138 = vmatprep.subr.mxu0 0.0
    %139 = vmatpush1.xpose.msra.mxu0 0.0
    %140 = vmatprep.mubr.f32.mxu0 %v72
    %141 = vmatmul.mubr.f32.gmra.mrb[0].mxu0 %v64
    %v142 = vpop.f32.mrb[0].mxu0
    %v143 = vadd.f32 %v54, %v142
    %v144 = vpop.f32.mrb[0].mxu0
    %145 = vdwg.mxu0
    %146 = vmatprep.subr.mxu0 0.0
    %147 = vmatpush1.xpose.msra.mxu0 %v48
    %148 = vmatprep.subr.mxu0 0.0
    %149 = vmatpush1.xpose.msra.mxu0 0.0
    %150 = vmatprep.subr.mxu0 0.0
    %151 = vmatpush1.xpose.msra.mxu0 0.0
    %152 = vmatprep.subr.mxu0 0.0
    %153 = vmatpush1.xpose.msra.mxu0 0.0
    %154 = vmatprep.subr.mxu0 0.0
    %155 = vmatpush1.xpose.msra.mxu0 0.0
    %156 = vmatprep.subr.mxu0 0.0
    %157 = vmatpush1.xpose.msra.mxu0 0.0
    %158 = vmatprep.subr.mxu0 0.0
    %159 = vmatpush1.xpose.msra.mxu0 0.0
    %160 = vmatprep.subr.mxu0 0.0
    %161 = vmatpush1.xpose.msra.mxu0 0.0
    %162 = vmatprep.subr.mxu0 0.0
    %163 = vmatpush1.xpose.msra.mxu0 0.0
    %164 = vmatprep.subr.mxu0 0.0
    %165 = vmatpush1.xpose.msra.mxu0 0.0
    %166 = vmatprep.subr.mxu0 0.0
    %167 = vmatpush1.xpose.msra.mxu0 0.0
    %168 = vmatprep.subr.mxu0 0.0
    %169 = vmatpush1.xpose.msra.mxu0 0.0
    %170 = vmatprep.subr.mxu0 0.0
    %171 = vmatpush1.xpose.msra.mxu0 0.0
    %172 = vmatprep.subr.mxu0 0.0
    %173 = vmatpush1.xpose.msra.mxu0 0.0
    %174 = vmatprep.subr.mxu0 0.0
    %175 = vmatpush1.xpose.msra.mxu0 0.0
    %176 = vmatprep.subr.mxu0 0.0
    %177 = vmatpush1.xpose.msra.mxu0 0.0
    %178 = vmatprep.subr.mxu0 0.0
    %179 = vmatpush1.xpose.msra.mxu0 0.0
    %180 = vmatprep.subr.mxu0 0.0
    %181 = vmatpush1.xpose.msra.mxu0 0.0
    %182 = vmatprep.subr.mxu0 0.0
    %183 = vmatpush1.xpose.msra.mxu0 0.0
    %184 = vmatprep.subr.mxu0 0.0
    %185 = vmatpush1.xpose.msra.mxu0 0.0
    %186 = vmatprep.subr.mxu0 0.0
    %187 = vmatpush1.xpose.msra.mxu0 0.0
    %188 = vmatprep.subr.mxu0 0.0
    %189 = vmatpush1.xpose.msra.mxu0 0.0
    %190 = vmatprep.subr.mxu0 0.0
    %191 = vmatpush1.xpose.msra.mxu0 0.0
    %192 = vmatprep.subr.mxu0 0.0
    %193 = vmatpush1.xpose.msra.mxu0 0.0
    %194 = vmatprep.subr.mxu0 0.0
    %195 = vmatpush1.xpose.msra.mxu0 0.0
    %196 = vmatprep.subr.mxu0 0.0
    %197 = vmatpush1.xpose.msra.mxu0 0.0
    %198 = vmatprep.subr.mxu0 0.0
    %199 = vmatpush1.xpose.msra.mxu0 0.0
    %200 = vmatprep.subr.mxu0 0.0
    %201 = vmatpush1.xpose.msra.mxu0 0.0
    %202 = vmatprep.subr.mxu0 0.0
    %203 = vmatpush1.xpose.msra.mxu0 0.0
    %204 = vmatprep.subr.mxu0 0.0
    %205 = vmatpush1.xpose.msra.mxu0 0.0
    %206 = vmatprep.subr.mxu0 0.0
    %207 = vmatpush1.xpose.msra.mxu0 0.0
    %208 = vmatprep.subr.mxu0 0.0
    %209 = vmatpush1.xpose.msra.mxu0 0.0
    %210 = vmatprep.mubr.f32.mxu0 0.0
    %211 = vmatmul.mubr.f32.gmra.mrb[0].mxu0 %v71
    %v212 = vpop.f32.mrb[0].mxu0
    %v213 = vadd.f32 %v143, %v212
    %v214 = vpop.f32.mrb[0].mxu0
    %215 = vdwg.mxu0
    %v216 = vmax.f32 %v213, 0.0
    %v217 = vld [vmem:[%s3] sm:$0x1]
    %v219 = vlaneseq
    %v220 = vshrl.u32 %v219, 7
    %v221 = vsub.s32 0, %v220
    %v222 = vrot.slane %v217, %v221
    %v224 = vmul.f32 %v216, %v222
    %vm225 = vcmask 58368
    %v226 = vsel %vm225, %v224, 0.0
    %227 = vadd.xlane.f32.xlu0 %v226
    %v228 = vpop.xlane.xlu0 %227
    %s229 = sld [smem:[#allocation2]]
    %v230 = vstv %s229
    %v231 = vadd.f32 %v228, %v230
    %v232 = vxor.u32 %v231, 2147483648
    %v233 = vmul.f32 %v232, 1.442695
    %v234 = vpow.pop %v233
    %v235 = vadd.f32 %v234, 1.0
    %v236 = vrcp.pop %v235
    %v237 = vmul.f32 1.0, %v236
    %vm238 = vcmask 1024
    %239 = vst.msk [vmem:[%s5] sm:$0x3] %vm238, %v237
    // Predicated region
    $region30: #{tpu_custom_call.1} parent=1 // pred_check
      _
    $region31: #{tpu_custom_call.1} parent=1 // pred_check_branch
      %241 = sbr.rel (0) target = $region33
    $region32: #{tpu_custom_call.1} parent=1 // pred_region
      _
    $region33: #{tpu_custom_call.1} parent=1 // pred_fallthru
      _
    // Predicated region
    $region34: #{tpu_custom_call.1} parent=1 // pred_check
      _
    $region35: #{tpu_custom_call.1} parent=1 // pred_check_branch
      %243 = sbr.rel (0) target = $region37
    $region36: #{tpu_custom_call.1} parent=1 // pred_region
      _
    $region37: #{tpu_custom_call.1} parent=1 // pred_fallthru
      _
    %244 = vsyncpa [#allocation4], 1
    %245 = vsyncpa [#allocation6], 1

</llo_original>
